<compile_context>
chip_gen: v5e
topology: v5e:2x2
jax: 0.10.0
libtpu: 0.0.40
codegen_flags: <defaults>
</compile_context>

<pallas_src>
import jax
import jax.numpy as jnp
from jax.experimental import pallas as pl
from jax.experimental.pallas import tpu as pltpu

LANE = 128


def _round_up(n, m):
    return ((n + m - 1) // m) * m


def linear_clamp_kernel(x_ref, w_ref, b_ref, o_ref):
    """x_ref: (IN, TR, 128) VMEM; w_ref: (IN, OUT) SMEM; b_ref: (OUT,) SMEM;
    o_ref: (OUT, TR, 128) VMEM.  Batch = rows*lanes, fully dense vregs."""
    in_f = x_ref.shape[0]
    out_f = o_ref.shape[0]

    # Hoist all SMEM scalar reads (15 weights + 5 biases) above the compute.
    ws = [[w_ref[k, j] for j in range(out_f)] for k in range(in_f)]
    bs = [b_ref[j] for j in range(out_f)]

    # Load each input feature row once as a dense (TR, 128) slab; reuse for
    # every output row.
    xs = [x_ref[k] for k in range(in_f)]          # static index -> (TR, 128)

    for j in range(out_f):                        # static unroll: out_f == 5
        acc = xs[0] * ws[0][j] + bs[j]            # scalar * dense slab on VPU
        for k in range(1, in_f):                  # static unroll: in_f == 3
            acc = acc + xs[k] * ws[k][j]
        acc = jnp.maximum(acc, 1.0)               # clamp_min
        acc = jnp.minimum(acc, 2.0)               # clamp_max
        o_ref[j] = acc.astype(o_ref.dtype)        # dense multi-vreg store


def linear_clamp(x, w, b, *, block_rows=64):
    """y = clip(x @ w + b, 1.0, 2.0).  x: (B, in), w: (in, out), b: (out,).

    block_rows * 128 batch elements are processed per grid step (default
    64 * 128 = 8192)."""
    B, in_f = x.shape
    out_f = w.shape[1]

    # --- layout plumbing (interface-imposed; producer could hand this over) ---
    # Feature-major, batch on (rows, lanes).  Pad batch to a multiple of 128
    # so the (rows, 128) reshape is a free contiguous view.
    b_pad = _round_up(B, LANE)
    xt = x.T                                      # (in, B)
    if b_pad != B:
        xt = jnp.pad(xt, ((0, 0), (0, b_pad - B)))
    n_rows = b_pad // LANE
    x3 = xt.reshape(in_f, n_rows, LANE)           # (in, rows, 128)

    # --- tile selection ---
    block_rows = max(8, _round_up(block_rows, 8))
    if n_rows > 8:
        # Ensure >=2 grid steps for large batches so the "parallel" batch axis
        # can actually be split across the two TensorCores on v7x.
        tb_rows = min(block_rows, _round_up(-(-n_rows // 2), 8))
    else:
        # Small batch: single full-extent block (block dim == full array dim
        # satisfies the (8,128) rule).
        tb_rows = n_rows
    grid = (pl.cdiv(n_rows, tb_rows),)            # partial last block is masked

    out3 = pl.pallas_call(
        linear_clamp_kernel,
        out_shape=jax.ShapeDtypeStruct((out_f, n_rows, LANE), x.dtype),
        grid_spec=pltpu.PrefetchScalarGridSpec(
            num_scalar_prefetch=0,
            grid=grid,
            in_specs=[
                # x tile: (3, tb_rows, 128), dense (8,128) sub-blocks,
                # pipelined (double-buffered) over the batch-row axis.
                # If DMA latency shows up vs compute, raise buffering with
                # pipeline_mode=pl.Buffered(3) here rather than shrinking tiles.
                pl.BlockSpec((in_f, tb_rows, LANE), lambda i: (0, i, 0)),
                # 15 weights + 5 biases live in SMEM and are read as scalars,
                # avoiding padded (8,128) VMEM tiles and an extra DMA stream.
                pl.BlockSpec(memory_space=pltpu.MemorySpace.SMEM),
                pl.BlockSpec(memory_space=pltpu.MemorySpace.SMEM),
            ],
            out_specs=pl.BlockSpec((out_f, tb_rows, LANE), lambda i: (0, i, 0)),
        ),
        compiler_params=pltpu.CompilerParams(
            # Batch-row axis is embarrassingly parallel -> megacore sharding.
            dimension_semantics=("parallel",),
        ),
    )(x3, w, b)

    # Back to torch's (B, out).  Padded batch columns were clamped into [1,2]
    # (harmless) and are sliced off here.
    return out3.reshape(out_f, b_pad)[:, :B].T


if __name__ == "__main__":
    key = jax.random.PRNGKey(0)
    kx, kw, kb = jax.random.split(key, 3)

    in_features, out_features, batch = 3, 5, 1

    # Parameters matching nn.Linear(3, 5); weight stored as (in, out) = W^T.
    w = jax.random.normal(kw, (in_features, out_features), dtype=jnp.float32) * 0.5
    b = jax.random.normal(kb, (out_features,), dtype=jnp.float32) * 0.5

    # Input consistent with torch.randn(1, 3).
    x = jax.random.normal(kx, (batch, in_features), dtype=jnp.float32)

    out = linear_clamp(x, w, b)
    jax.block_until_ready(out)
    ref = jnp.clip(x @ w + b, 1.0, 2.0)
    assert out.shape == ref.shape
    assert jnp.allclose(out, ref, atol=1e-5), (out, ref)

    # Exercise the multi-step grid with a partial last block (padding + mask).
    x_big = jax.random.normal(kx, (10000, in_features), dtype=jnp.float32)
    out_big = linear_clamp(x_big, w, b)
    jax.block_until_ready(out_big)
    ref_big = jnp.clip(x_big @ w + b, 1.0, 2.0)
    assert jnp.allclose(out_big, ref_big, atol=1e-5)

    # Single-block small-batch path (n_rows <= 8).
    x_mid = jax.random.normal(kb, (300, in_features), dtype=jnp.float32)
    out_mid = linear_clamp(x_mid, w, b)
    jax.block_until_ready(out_mid)
    ref_mid = jnp.clip(x_mid @ w + b, 1.0, 2.0)
    assert jnp.allclose(out_mid, ref_mid, atol=1e-5)

    print("KERNEL_OK")
</pallas_src>

<mosaic_0001>
module attributes {stable_mosaic.version = 11 : i64} {
  func.func @linear_clamp_kernel(%arg0: i32, %arg1: memref<3x1x128xf32, #tpu.memory_space<vmem>>, %arg2: memref<3x5xf32, #tpu.memory_space<smem>>, %arg3: memref<5xf32, #tpu.memory_space<smem>>, %arg4: memref<5x1x128xf32, #tpu.memory_space<vmem>>) attributes {dimension_semantics = [#tpu.dimension_semantics<parallel>], iteration_bounds = array<i64: 1>, scalar_prefetch = 0 : i64, scratch_operands = 0 : i64, tpu.core_type = #tpu.core_type<tc>, window_params = [{transform_indices = @transform_0, window_bounds = array<i64: 3, 1, 128>}, {transform_indices = @transform_1, window_bounds = array<i64: 3, 5>}, {transform_indices = @transform_2, window_bounds = array<i64: 5>}, {transform_indices = @transform_3, window_bounds = array<i64: 5, 1, 128>}]} {
    %c0 = arith.constant 0 : index
    %c0_0 = arith.constant 0 : index
    %0 = memref.load %arg2[%c0, %c0_0] : memref<3x5xf32, #tpu.memory_space<smem>>
    %c0_1 = arith.constant 0 : index
    %c1 = arith.constant 1 : index
    %1 = memref.load %arg2[%c0_1, %c1] : memref<3x5xf32, #tpu.memory_space<smem>>
    %c0_2 = arith.constant 0 : index
    %c2 = arith.constant 2 : index
    %2 = memref.load %arg2[%c0_2, %c2] : memref<3x5xf32, #tpu.memory_space<smem>>
    %c0_3 = arith.constant 0 : index
    %c3 = arith.constant 3 : index
    %3 = memref.load %arg2[%c0_3, %c3] : memref<3x5xf32, #tpu.memory_space<smem>>
    %c0_4 = arith.constant 0 : index
    %c4 = arith.constant 4 : index
    %4 = memref.load %arg2[%c0_4, %c4] : memref<3x5xf32, #tpu.memory_space<smem>>
    %c1_5 = arith.constant 1 : index
    %c0_6 = arith.constant 0 : index
    %5 = memref.load %arg2[%c1_5, %c0_6] : memref<3x5xf32, #tpu.memory_space<smem>>
    %c1_7 = arith.constant 1 : index
    %c1_8 = arith.constant 1 : index
    %6 = memref.load %arg2[%c1_7, %c1_8] : memref<3x5xf32, #tpu.memory_space<smem>>
    %c1_9 = arith.constant 1 : index
    %c2_10 = arith.constant 2 : index
    %7 = memref.load %arg2[%c1_9, %c2_10] : memref<3x5xf32, #tpu.memory_space<smem>>
    %c1_11 = arith.constant 1 : index
    %c3_12 = arith.constant 3 : index
    %8 = memref.load %arg2[%c1_11, %c3_12] : memref<3x5xf32, #tpu.memory_space<smem>>
    %c1_13 = arith.constant 1 : index
    %c4_14 = arith.constant 4 : index
    %9 = memref.load %arg2[%c1_13, %c4_14] : memref<3x5xf32, #tpu.memory_space<smem>>
    %c2_15 = arith.constant 2 : index
    %c0_16 = arith.constant 0 : index
    %10 = memref.load %arg2[%c2_15, %c0_16] : memref<3x5xf32, #tpu.memory_space<smem>>
    %c2_17 = arith.constant 2 : index
    %c1_18 = arith.constant 1 : index
    %11 = memref.load %arg2[%c2_17, %c1_18] : memref<3x5xf32, #tpu.memory_space<smem>>
    %c2_19 = arith.constant 2 : index
    %c2_20 = arith.constant 2 : index
    %12 = memref.load %arg2[%c2_19, %c2_20] : memref<3x5xf32, #tpu.memory_space<smem>>
    %c2_21 = arith.constant 2 : index
    %c3_22 = arith.constant 3 : index
    %13 = memref.load %arg2[%c2_21, %c3_22] : memref<3x5xf32, #tpu.memory_space<smem>>
    %c2_23 = arith.constant 2 : index
    %c4_24 = arith.constant 4 : index
    %14 = memref.load %arg2[%c2_23, %c4_24] : memref<3x5xf32, #tpu.memory_space<smem>>
    %c0_25 = arith.constant 0 : index
    %15 = memref.load %arg3[%c0_25] : memref<5xf32, #tpu.memory_space<smem>>
    %c1_26 = arith.constant 1 : index
    %16 = memref.load %arg3[%c1_26] : memref<5xf32, #tpu.memory_space<smem>>
    %c2_27 = arith.constant 2 : index
    %17 = memref.load %arg3[%c2_27] : memref<5xf32, #tpu.memory_space<smem>>
    %c3_28 = arith.constant 3 : index
    %18 = memref.load %arg3[%c3_28] : memref<5xf32, #tpu.memory_space<smem>>
    %c4_29 = arith.constant 4 : index
    %19 = memref.load %arg3[%c4_29] : memref<5xf32, #tpu.memory_space<smem>>
    %c0_30 = arith.constant 0 : index
    %c0_31 = arith.constant 0 : index
    %c0_32 = arith.constant 0 : index
    %20 = vector.load %arg1[%c0_30, %c0_31, %c0_32] : memref<3x1x128xf32, #tpu.memory_space<vmem>>, vector<1x1x128xf32>
    %21 = vector.shape_cast %20 : vector<1x1x128xf32> to vector<1x128xf32>
    %c1_33 = arith.constant 1 : index
    %c0_34 = arith.constant 0 : index
    %c0_35 = arith.constant 0 : index
    %22 = vector.load %arg1[%c1_33, %c0_34, %c0_35] : memref<3x1x128xf32, #tpu.memory_space<vmem>>, vector<1x1x128xf32>
    %23 = vector.shape_cast %22 : vector<1x1x128xf32> to vector<1x128xf32>
    %c2_36 = arith.constant 2 : index
    %c0_37 = arith.constant 0 : index
    %c0_38 = arith.constant 0 : index
    %24 = vector.load %arg1[%c2_36, %c0_37, %c0_38] : memref<3x1x128xf32, #tpu.memory_space<vmem>>, vector<1x1x128xf32>
    %25 = vector.shape_cast %24 : vector<1x1x128xf32> to vector<1x128xf32>
    %26 = vector.broadcast %0 : f32 to vector<1x128xf32>
    %27 = arith.mulf %21, %26 : vector<1x128xf32>
    %28 = vector.broadcast %15 : f32 to vector<1x128xf32>
    %29 = arith.addf %27, %28 : vector<1x128xf32>
    %30 = vector.broadcast %5 : f32 to vector<1x128xf32>
    %31 = arith.mulf %23, %30 : vector<1x128xf32>
    %32 = arith.addf %29, %31 : vector<1x128xf32>
    %33 = vector.broadcast %10 : f32 to vector<1x128xf32>
    %34 = arith.mulf %25, %33 : vector<1x128xf32>
    %35 = arith.addf %32, %34 : vector<1x128xf32>
    %cst = arith.constant 1.000000e+00 : f32
    %36 = vector.broadcast %cst : f32 to vector<1x128xf32>
    %37 = arith.maximumf %35, %36 : vector<1x128xf32>
    %cst_39 = arith.constant 2.000000e+00 : f32
    %38 = vector.broadcast %cst_39 : f32 to vector<1x128xf32>
    %39 = arith.minimumf %37, %38 : vector<1x128xf32>
    %c0_40 = arith.constant 0 : index
    %c0_41 = arith.constant 0 : index
    %c0_42 = arith.constant 0 : index
    %40 = vector.load %arg4[%c0_40, %c0_41, %c0_42] : memref<5x1x128xf32, #tpu.memory_space<vmem>>, vector<1x1x128xf32>
    %41 = vector.shape_cast %40 : vector<1x1x128xf32> to vector<1x128xf32>
    %42 = vector.shape_cast %39 : vector<1x128xf32> to vector<1x1x128xf32>
    tpu.vector_store %arg4[%c0_40, %c0_41, %c0_42], %42 {strides = array<i32>} : memref<5x1x128xf32, #tpu.memory_space<vmem>>, vector<1x1x128xf32>,
    %43 = vector.broadcast %1 : f32 to vector<1x128xf32>
    %44 = arith.mulf %21, %43 : vector<1x128xf32>
    %45 = vector.broadcast %16 : f32 to vector<1x128xf32>
    %46 = arith.addf %44, %45 : vector<1x128xf32>
    %47 = vector.broadcast %6 : f32 to vector<1x128xf32>
    %48 = arith.mulf %23, %47 : vector<1x128xf32>
    %49 = arith.addf %46, %48 : vector<1x128xf32>
    %50 = vector.broadcast %11 : f32 to vector<1x128xf32>
    %51 = arith.mulf %25, %50 : vector<1x128xf32>
    %52 = arith.addf %49, %51 : vector<1x128xf32>
    %cst_43 = arith.constant 1.000000e+00 : f32
    %53 = vector.broadcast %cst_43 : f32 to vector<1x128xf32>
    %54 = arith.maximumf %52, %53 : vector<1x128xf32>
    %cst_44 = arith.constant 2.000000e+00 : f32
    %55 = vector.broadcast %cst_44 : f32 to vector<1x128xf32>
    %56 = arith.minimumf %54, %55 : vector<1x128xf32>
    %c1_45 = arith.constant 1 : index
    %c0_46 = arith.constant 0 : index
    %c0_47 = arith.constant 0 : index
    %57 = vector.load %arg4[%c1_45, %c0_46, %c0_47] : memref<5x1x128xf32, #tpu.memory_space<vmem>>, vector<1x1x128xf32>
    %58 = vector.shape_cast %57 : vector<1x1x128xf32> to vector<1x128xf32>
    %59 = vector.shape_cast %56 : vector<1x128xf32> to vector<1x1x128xf32>
    tpu.vector_store %arg4[%c1_45, %c0_46, %c0_47], %59 {strides = array<i32>} : memref<5x1x128xf32, #tpu.memory_space<vmem>>, vector<1x1x128xf32>,
    %60 = vector.broadcast %2 : f32 to vector<1x128xf32>
    %61 = arith.mulf %21, %60 : vector<1x128xf32>
    %62 = vector.broadcast %17 : f32 to vector<1x128xf32>
    %63 = arith.addf %61, %62 : vector<1x128xf32>
    %64 = vector.broadcast %7 : f32 to vector<1x128xf32>
    %65 = arith.mulf %23, %64 : vector<1x128xf32>
    %66 = arith.addf %63, %65 : vector<1x128xf32>
    %67 = vector.broadcast %12 : f32 to vector<1x128xf32>
    %68 = arith.mulf %25, %67 : vector<1x128xf32>
    %69 = arith.addf %66, %68 : vector<1x128xf32>
    %cst_48 = arith.constant 1.000000e+00 : f32
    %70 = vector.broadcast %cst_48 : f32 to vector<1x128xf32>
    %71 = arith.maximumf %69, %70 : vector<1x128xf32>
    %cst_49 = arith.constant 2.000000e+00 : f32
    %72 = vector.broadcast %cst_49 : f32 to vector<1x128xf32>
    %73 = arith.minimumf %71, %72 : vector<1x128xf32>
    %c2_50 = arith.constant 2 : index
    %c0_51 = arith.constant 0 : index
    %c0_52 = arith.constant 0 : index
    %74 = vector.load %arg4[%c2_50, %c0_51, %c0_52] : memref<5x1x128xf32, #tpu.memory_space<vmem>>, vector<1x1x128xf32>
    %75 = vector.shape_cast %74 : vector<1x1x128xf32> to vector<1x128xf32>
    %76 = vector.shape_cast %73 : vector<1x128xf32> to vector<1x1x128xf32>
    tpu.vector_store %arg4[%c2_50, %c0_51, %c0_52], %76 {strides = array<i32>} : memref<5x1x128xf32, #tpu.memory_space<vmem>>, vector<1x1x128xf32>,
    %77 = vector.broadcast %3 : f32 to vector<1x128xf32>
    %78 = arith.mulf %21, %77 : vector<1x128xf32>
    %79 = vector.broadcast %18 : f32 to vector<1x128xf32>
    %80 = arith.addf %78, %79 : vector<1x128xf32>
    %81 = vector.broadcast %8 : f32 to vector<1x128xf32>
    %82 = arith.mulf %23, %81 : vector<1x128xf32>
    %83 = arith.addf %80, %82 : vector<1x128xf32>
    %84 = vector.broadcast %13 : f32 to vector<1x128xf32>
    %85 = arith.mulf %25, %84 : vector<1x128xf32>
    %86 = arith.addf %83, %85 : vector<1x128xf32>
    %cst_53 = arith.constant 1.000000e+00 : f32
    %87 = vector.broadcast %cst_53 : f32 to vector<1x128xf32>
    %88 = arith.maximumf %86, %87 : vector<1x128xf32>
    %cst_54 = arith.constant 2.000000e+00 : f32
    %89 = vector.broadcast %cst_54 : f32 to vector<1x128xf32>
    %90 = arith.minimumf %88, %89 : vector<1x128xf32>
    %c3_55 = arith.constant 3 : index
    %c0_56 = arith.constant 0 : index
    %c0_57 = arith.constant 0 : index
    %91 = vector.load %arg4[%c3_55, %c0_56, %c0_57] : memref<5x1x128xf32, #tpu.memory_space<vmem>>, vector<1x1x128xf32>
    %92 = vector.shape_cast %91 : vector<1x1x128xf32> to vector<1x128xf32>
    %93 = vector.shape_cast %90 : vector<1x128xf32> to vector<1x1x128xf32>
    tpu.vector_store %arg4[%c3_55, %c0_56, %c0_57], %93 {strides = array<i32>} : memref<5x1x128xf32, #tpu.memory_space<vmem>>, vector<1x1x128xf32>,
    %94 = vector.broadcast %4 : f32 to vector<1x128xf32>
    %95 = arith.mulf %21, %94 : vector<1x128xf32>
    %96 = vector.broadcast %19 : f32 to vector<1x128xf32>
    %97 = arith.addf %95, %96 : vector<1x128xf32>
    %98 = vector.broadcast %9 : f32 to vector<1x128xf32>
    %99 = arith.mulf %23, %98 : vector<1x128xf32>
    %100 = arith.addf %97, %99 : vector<1x128xf32>
    %101 = vector.broadcast %14 : f32 to vector<1x128xf32>
    %102 = arith.mulf %25, %101 : vector<1x128xf32>
    %103 = arith.addf %100, %102 : vector<1x128xf32>
    %cst_58 = arith.constant 1.000000e+00 : f32
    %104 = vector.broadcast %cst_58 : f32 to vector<1x128xf32>
    %105 = arith.maximumf %103, %104 : vector<1x128xf32>
    %cst_59 = arith.constant 2.000000e+00 : f32
    %106 = vector.broadcast %cst_59 : f32 to vector<1x128xf32>
    %107 = arith.minimumf %105, %106 : vector<1x128xf32>
    %c4_60 = arith.constant 4 : index
    %c0_61 = arith.constant 0 : index
    %c0_62 = arith.constant 0 : index
    %108 = vector.load %arg4[%c4_60, %c0_61, %c0_62] : memref<5x1x128xf32, #tpu.memory_space<vmem>>, vector<1x1x128xf32>
    %109 = vector.shape_cast %108 : vector<1x1x128xf32> to vector<1x128xf32>
    %110 = vector.shape_cast %107 : vector<1x128xf32> to vector<1x1x128xf32>
    tpu.vector_store %arg4[%c4_60, %c0_61, %c0_62], %110 {strides = array<i32>} : memref<5x1x128xf32, #tpu.memory_space<vmem>>, vector<1x1x128xf32>,
    return
  }
  func.func @transform_0(%arg0: i32) -> (i32, i32, i32) {
    %c0_i32 = arith.constant 0 : i32
    %c0_i32_0 = arith.constant 0 : i32
    %c0_i32_1 = arith.constant 0 : i32
    return %c0_i32, %arg0, %c0_i32_0 : i32, i32, i32
  }
  func.func @transform_1(%arg0: i32) -> (i32, i32) {
    %c0_i32 = arith.constant 0 : i32
    %c0_i32_0 = arith.constant 0 : i32
    %c0_i32_1 = arith.constant 0 : i32
    return %c0_i32, %c0_i32_0 : i32, i32
  }
  func.func @transform_2(%arg0: i32) -> i32 {
    %c0_i32 = arith.constant 0 : i32
    %c0_i32_0 = arith.constant 0 : i32
    return %c0_i32 : i32
  }
  func.func @transform_3(%arg0: i32) -> (i32, i32, i32) {
    %c0_i32 = arith.constant 0 : i32
    %c0_i32_0 = arith.constant 0 : i32
    %c0_i32_1 = arith.constant 0 : i32
    return %c0_i32, %arg0, %c0_i32_0 : i32, i32, i32
  }
}

</mosaic_0001>

<llo_original>
// kernel: tpu_custom_call.1
$region0: #{tpu_custom_call.1}
  #allocation0 [shape = 'u32[]', space=smem, size = 0x4, offset = 0x4, fixed_abs, tag = 'smem constant byte address 0x4 - core index']
  #allocation1 [shape = 'u32[72,128]{1,0:T(1,128)}', space=vmem, size = 0x9000, scoped, tag = 'internal scratch']
  %s0 = inlined_call_operand.hbm [shape: f32[3,1,128], index: 0, kind: input, shape index: {}]
  %s1 = inlined_call_operand.hbm [shape: f32[3,5], index: 1, kind: input, shape index: {}]
  %s2 = inlined_call_operand.vmem [shape: f32[5], index: 2, kind: input, shape index: {}]
  %s3 = inlined_call_operand.hbm [shape: f32[5,1,128], index: 3, kind: output, shape index: {}]
  %s4 = sld [smem:[#allocation0]]
  $region34: #{tpu_custom_call.1} parent=0
    _
  %s6 = ssub.s32 1, %s4
  %s7 = scalar_select 0, %s6, %s4
  $region1: #{tpu_custom_call.1} parent=0
    #allocation2 [shape = 'u8[1536]{0}', space=vmem, size = 0x800, scoped, tag = 'input window, operand 0, single buffered']
    #allocation3 [shape = 's32[1]{0}', space=sflag, size = 0x4, scoped, tag = 'scoped memory for tpu_custom_call.1']
    #allocation4 [shape = 's32[1]{0}', space=sflag, size = 0x4, scoped, tag = 'scoped memory for tpu_custom_call.1']
    #allocation5 [shape = 's32[1]{0}', space=sflag, size = 0x4, scoped, tag = 'scoped memory for tpu_custom_call.1']
    #allocation6 [shape = 's32[1]{0}', space=sflag, size = 0x4, scoped, tag = 'scoped memory for tpu_custom_call.1']
    #allocation7 [shape = 'u8[2048]{0}', space=smem, size = 0x800, scoped, tag = 'input window, operand 1, single buffered']
    #allocation8 [shape = 'u8[512]{0}', space=smem, size = 0x200, scoped, tag = 'input window, operand 2, single buffered']
    #allocation9 [shape = 'u8[2560]{0}', space=vmem, size = 0xc00, scoped, tag = 'output window, operand 0, single buffered']
    %8 = vsyncpa [#allocation3], 0
    %9 = vsyncpa [#allocation5], 0
    %10 = vsyncpa [#allocation6], 0
    %11 = vsyncpa [#allocation4], 0
    // Predicated region
    $region2: #{tpu_custom_call.1} parent=1 // pred_check
      _
    $region3: #{tpu_custom_call.1} parent=1 // pred_check_branch
      %13 = sbr.rel (0) target = $region5
    $region4: #{tpu_custom_call.1} parent=1 // pred_region
      %15 = vsyncadd [#allocation3], 0
      %s16 = sshll.u32 %s0, 4
      %s17 = int_to_ptr.hbm [resolvable:$true] %s16
      %s18 = sshll.u32 [#allocation2], 4
      %s19 = int_to_ptr.vmem [resolvable:$true] %s18
      %24 = dma.hbm_to_vmem [thread:$0]  %s17, 48, %s19, [#allocation3], 16, 16, 1
    $region5: #{tpu_custom_call.1} parent=1 // pred_fallthru
      _
    // Predicated region
    $region6: #{tpu_custom_call.1} parent=1 // pred_check
      _
    $region7: #{tpu_custom_call.1} parent=1 // pred_check_branch
      %26 = sbr.rel (0) target = $region9
    $region8: #{tpu_custom_call.1} parent=1 // pred_region
      %28 = vsyncadd [#allocation5], 0
      %s30 = sshll.u32 %s1, 4
      %s31 = int_to_ptr.hbm [resolvable:$true] %s30
      %33 = dma.hbm_to_smem %s31, 64, [#allocation7], [#allocation5]
    $region9: #{tpu_custom_call.1} parent=1 // pred_fallthru
      _
    // Predicated region
    $region10: #{tpu_custom_call.1} parent=1 // pred_check
      _
    $region11: #{tpu_custom_call.1} parent=1 // pred_check_branch
      %35 = sbr.rel (0) target = $region13
    $region12: #{tpu_custom_call.1} parent=1 // pred_region
      %37 = vsyncadd [#allocation6], 0
      %s39 = sshll.u32 %s2, 4
      %s40 = int_to_ptr.vmem [resolvable:$true] %s39
      %42 = dma.vmem_to_smem %s40, 16, [#allocation8], [#allocation6]
    $region13: #{tpu_custom_call.1} parent=1 // pred_fallthru
      _
    // Predicated region
    $region14: #{tpu_custom_call.1} parent=1 // pred_check
      _
    $region15: #{tpu_custom_call.1} parent=1 // pred_check_branch
      %44 = sbr.rel (0) target = $region17
    $region16: #{tpu_custom_call.1} parent=1 // pred_region
      %46 = dma.done [#allocation3], 48
    $region17: #{tpu_custom_call.1} parent=1 // pred_fallthru
      _
    // Predicated region
    $region18: #{tpu_custom_call.1} parent=1 // pred_check
      _
    $region19: #{tpu_custom_call.1} parent=1 // pred_check_branch
      %48 = sbr.rel (0) target = $region21
    $region20: #{tpu_custom_call.1} parent=1 // pred_region
      %50 = dma.done [#allocation5], 64
    $region21: #{tpu_custom_call.1} parent=1 // pred_fallthru
      _
    // Predicated region
    $region22: #{tpu_custom_call.1} parent=1 // pred_check
      _
    $region23: #{tpu_custom_call.1} parent=1 // pred_check_branch
      %52 = sbr.rel (0) target = $region25
    $region24: #{tpu_custom_call.1} parent=1 // pred_region
      %54 = dma.done [#allocation6], 16
    $region25: #{tpu_custom_call.1} parent=1 // pred_fallthru
      _
    %55 = sfence
    %s56 = sld [smem:[#allocation7]]
    %s57 = sld [smem:[#allocation7 + $0x1]]
    %s58 = sld [smem:[#allocation7 + $0x2]]
    %s59 = sld [smem:[#allocation7 + $0x3]]
    %s60 = sld [smem:[#allocation7 + $0x4]]
    %s61 = sld [smem:[#allocation7 + $0x80]]
    %s62 = sld [smem:[#allocation7 + $0x81]]
    %s63 = sld [smem:[#allocation7 + $0x82]]
    %s64 = sld [smem:[#allocation7 + $0x83]]
    %s65 = sld [smem:[#allocation7 + $0x84]]
    %s66 = sld [smem:[#allocation7 + $0x100]]
    %s67 = sld [smem:[#allocation7 + $0x101]]
    %s68 = sld [smem:[#allocation7 + $0x102]]
    %s69 = sld [smem:[#allocation7 + $0x103]]
    %s70 = sld [smem:[#allocation7 + $0x104]]
    %s71 = sld [smem:[#allocation8]]
    %s72 = sld [smem:[#allocation8 + $0x1]]
    %s73 = sld [smem:[#allocation8 + $0x2]]
    %s74 = sld [smem:[#allocation8 + $0x3]]
    %s75 = sld [smem:[#allocation8 + $0x4]]
    %v76 = vld [vmem:[#allocation2] sm:$0x1]
    %s77 = scalar_lea.vmem [#allocation2], 1
    %v78 = vld [vmem:[%s77] sm:$0x1]
    %s79 = scalar_lea.vmem [#allocation2], 2
    %v80 = vld [vmem:[%s79] sm:$0x1]
    %v81 = vstv %s56
    %v82 = vmul.f32 %v76, %v81
    %v83 = vstv %s71
    %v84 = vadd.f32 %v82, %v83
    %v85 = vstv %s61
    %v86 = vmul.f32 %v78, %v85
    %v87 = vadd.f32 %v84, %v86
    %v88 = vstv %s66
    %v89 = vmul.f32 %v80, %v88
    %v90 = vadd.f32 %v87, %v89
    %v91 = vmax.f32 %v90, 1.0
    %v92 = vmin.f32 %v91, 2.0
    %93 = vst [vmem:[#allocation9] sm:$0x1] %v92
    %v94 = vstv %s57
    %v95 = vmul.f32 %v76, %v94
    %v96 = vstv %s72
    %v97 = vadd.f32 %v95, %v96
    %v98 = vstv %s62
    %v99 = vmul.f32 %v78, %v98
    %v100 = vadd.f32 %v97, %v99
    %v101 = vstv %s67
    %v102 = vmul.f32 %v80, %v101
    %v103 = vadd.f32 %v100, %v102
    %v104 = vmax.f32 %v103, 1.0
    %v105 = vmin.f32 %v104, 2.0
    %s106 = scalar_lea.vmem [#allocation9], 1
    %107 = vst [vmem:[%s106] sm:$0x1] %v105
    %v108 = vstv %s58
    %v109 = vmul.f32 %v76, %v108
    %v110 = vstv %s73
    %v111 = vadd.f32 %v109, %v110
    %v112 = vstv %s63
    %v113 = vmul.f32 %v78, %v112
    %v114 = vadd.f32 %v111, %v113
    %v115 = vstv %s68
    %v116 = vmul.f32 %v80, %v115
    %v117 = vadd.f32 %v114, %v116
    %v118 = vmax.f32 %v117, 1.0
    %v119 = vmin.f32 %v118, 2.0
    %s120 = scalar_lea.vmem [#allocation9], 2
    %121 = vst [vmem:[%s120] sm:$0x1] %v119
    %v122 = vstv %s59
    %v123 = vmul.f32 %v76, %v122
    %v124 = vstv %s74
    %v125 = vadd.f32 %v123, %v124
    %v126 = vstv %s64
    %v127 = vmul.f32 %v78, %v126
    %v128 = vadd.f32 %v125, %v127
    %v129 = vstv %s69
    %v130 = vmul.f32 %v80, %v129
    %v131 = vadd.f32 %v128, %v130
    %v132 = vmax.f32 %v131, 1.0
    %v133 = vmin.f32 %v132, 2.0
    %s134 = scalar_lea.vmem [#allocation9], 3
    %135 = vst [vmem:[%s134] sm:$0x1] %v133
    %v136 = vstv %s60
    %v137 = vmul.f32 %v76, %v136
    %v138 = vstv %s75
    %v139 = vadd.f32 %v137, %v138
    %v140 = vstv %s65
    %v141 = vmul.f32 %v78, %v140
    %v142 = vadd.f32 %v139, %v141
    %v143 = vstv %s70
    %v144 = vmul.f32 %v80, %v143
    %v145 = vadd.f32 %v142, %v144
    %v146 = vmax.f32 %v145, 1.0
    %v147 = vmin.f32 %v146, 2.0
    %s148 = scalar_lea.vmem [#allocation9], 4
    %149 = vst [vmem:[%s148] sm:$0x1] %v147
    // Predicated region
    $region26: #{tpu_custom_call.1} parent=1 // pred_check
      _
    $region27: #{tpu_custom_call.1} parent=1 // pred_check_branch
      %151 = sbr.rel (0) target = $region29
    $region28: #{tpu_custom_call.1} parent=1 // pred_region
      %153 = vsyncadd [#allocation4], 0
      %s154 = sshll.u32 [#allocation9], 4
      %s155 = int_to_ptr.vmem [resolvable:$true] %s154
      %s156 = sshll.u32 %s3, 4
      %s157 = int_to_ptr.hbm [resolvable:$true] %s156
      %162 = dma.vmem_to_hbm [thread:$0]  %s155, 80, %s157, [#allocation4], 16, 16, 1
    $region29: #{tpu_custom_call.1} parent=1 // pred_fallthru
      _
    // Predicated region
    $region30: #{tpu_custom_call.1} parent=1 // pred_check
      _
    $region31: #{tpu_custom_call.1} parent=1 // pred_check_branch
      %164 = sbr.rel (0) target = $region33
    $region32: #{tpu_custom_call.1} parent=1 // pred_region
      %166 = dma.done [#allocation4], 80
    $region33: #{tpu_custom_call.1} parent=1 // pred_fallthru
      _
    %167 = vsyncpa [#allocation3], 1
    %168 = vsyncpa [#allocation4], 1
    %169 = vsyncpa [#allocation5], 1
    %170 = vsyncpa [#allocation6], 1

</llo_original>
